<compile_context>
chip_gen: v6e
topology: v6e:2x2x1
jax: 0.10.0
libtpu: 0.0.40
codegen_flags: <defaults>
</compile_context>

<pallas_src>
import functools

import jax
import jax.numpy as jnp
from jax import lax
from jax.experimental import pallas as pl
from jax.experimental.pallas import tpu as pltpu


def _es_kernel(a_ref, p_ref, x_ref, o_ref, prev_ref, *, tt, T):
    """One (tt, Cc) time-chunk of one batch row (batch dim squeezed away).

    a_ref   : (tt, tt) fp32  lower-triangular scan matrix
    p_ref   : (tt, 1)  fp32  carry coefficients alpha^(i+1)
    x_ref   : (tt, Cc) input chunk
    o_ref   : (tt, Cc) output chunk
    prev_ref: (1, Cc)  fp32  carry s_{t-1} across time chunks (VMEM scratch)
    """
    tb = pl.program_id(2)  # time-chunk index (0 == start of the sequence)

    # Seed the carry with x_0 at the first chunk: (1-a)*x0 + a*x0 == x0, so the
    # closed form reproduces s_0 exactly without any per-row select.
    @pl.when(tb == 0)
    def _():
        prev_ref[...] = x_ref[0:1, :].astype(jnp.float32)

    x = x_ref[...].astype(jnp.float32)  # (tt, Cc)

    if T % tt != 0:
        # Zero the OOB-padded tail rows of the (only) partial chunk so that
        # undefined padded data cannot contaminate in-bounds rows via 0*NaN
        # inside the matmul.  Static no-op when tt divides T.
        rem = T - tb * tt
        row = lax.broadcasted_iota(jnp.int32, (tt, 1), 0)
        x = jnp.where(row < rem, x, 0.0)

    # Blocked scan (closed form of the recurrence) on the MXU:
    #   s_i = sum_{j<=i} (1-a) a^(i-j) x_j  +  a^(i+1) * prev
    s = jnp.dot(a_ref[...], x, preferred_element_type=jnp.float32)
    s = s + p_ref[...] * prev_ref[...]            # (tt,1)*(1,Cc) -> (tt,Cc)

    o_ref[...] = s.astype(o_ref.dtype)
    # Carry the last row to the next chunk.  For a partial last chunk this is
    # garbage-free (masked-zero inputs) and is never read: the next grid step
    # has tb == 0 and re-seeds the carry.
    prev_ref[...] = s[tt - 1:tt, :]


def es_normalize(x, alpha, columns=None, pre_step=0, block_t=None):
    """Pallas implementation of ES_Normalize.forward for x of shape (B, T, C)."""
    B, T, C = x.shape
    itemsize = jnp.dtype(x.dtype).itemsize
    alpha = float(alpha)

    # ---- generation-aware knobs (host side, best-effort) -------------------
    vmem_cap = 64 * 1024 * 1024
    try:
        vmem_cap = int(pltpu.get_tpu_info().vmem_capacity_bytes)
    except Exception:
        pass
    big_vmem = vmem_cap >= 100 * 1024 * 1024          # v5e / v6e: 128 MiB parts
    budget = (40 if big_vmem else 24) * 1024 * 1024   # in+out double-buffered
    vmem_limit = (96 if big_vmem else 48) * 1024 * 1024

    tt_target = 256                                   # one MXU tile on v6e/v7x
    try:
        kind = jax.devices()[0].device_kind.lower()
        if "v5 lite" in kind or "v5lite" in kind or "v5e" in kind:
            tt_target = 128                           # v5e MXU is 128x128
    except Exception:
        pass

    # ---- channel split: second parallel axis when the batch can't be split --
    nc = 2 if (B == 1 and C % 256 == 0) else 1        # keeps Cc % 128 == 0
    Cc = C // nc

    # ---- time-chunk size -----------------------------------------------------
    if block_t is not None:
        tt = max(1, min(int(block_t), T))
    else:
        tt = min(tt_target, T)
        max_rows = max(8, budget // (4 * max(1, Cc * itemsize)))
        tt = min(tt, max_rows)
    if tt != T:
        tt = max(8, (tt // 8) * 8)  # second-to-last block dim must be 8-aligned

    # ---- host-side scan constants (tiny; alpha enters only as data, so a new
    # ---- alpha does NOT trigger a recompile) ---------------------------------
    idx = jnp.arange(tt, dtype=jnp.float32)
    diff = idx[:, None] - idx[None, :]
    expnt = jnp.maximum(diff, 0.0)
    A = jnp.where(diff >= 0.0, (1.0 - alpha) * (alpha ** expnt), 0.0)
    A = A.astype(jnp.float32)                         # (tt, tt)
    p = (alpha ** (idx + 1.0))[:, None].astype(jnp.float32)  # (tt, 1)

    grid = (B, nc, pl.cdiv(T, tt))

    out = pl.pallas_call(
        functools.partial(_es_kernel, tt=tt, T=T),
        out_shape=jax.ShapeDtypeStruct((B, T, C), x.dtype),
        grid_spec=pltpu.PrefetchScalarGridSpec(
            num_scalar_prefetch=0,
            grid=grid,
            in_specs=[
                # Constant blocks: same index every step -> DMA'd once.
                pl.BlockSpec((tt, tt), lambda b, c, t: (0, 0)),
                pl.BlockSpec((tt, 1), lambda b, c, t: (0, 0)),
                # Per-batch-row (squeezed) time x channel slab.
                pl.BlockSpec((None, tt, Cc), lambda b, c, t: (b, t, c)),
            ],
            out_specs=pl.BlockSpec((None, tt, Cc), lambda b, c, t: (b, t, c)),
            scratch_shapes=[pltpu.VMEM((1, Cc), jnp.float32)],
        ),
        compiler_params=pltpu.CompilerParams(
            # batch / channel blocks independent -> parallel; time is a true
            # recurrence -> arbitrary (must stay innermost for the carry).
            dimension_semantics=("parallel", "parallel", "arbitrary"),
            vmem_limit_bytes=vmem_limit,
        ),
    )(A, p, x)

    lo = T - 1 - pre_step
    if columns is None:
        second = out[:, lo:T, None]                   # (B, pre_step+1, 1, C)
    else:
        second = out[:, lo:T, jnp.asarray(columns)]   # (B, pre_step+1, len(columns))
    return out, second


def _reference(x, alpha, columns=None, pre_step=0):
    """Pure-JAX reference reproducing the PyTorch loop exactly."""
    B, T, C = x.shape
    outs = [x[:, 0, :]]
    for i in range(1, T):
        outs.append((1.0 - alpha) * x[:, i, :] + alpha * outs[-1])
    out = jnp.stack(outs, axis=1)
    lo = T - 1 - pre_step
    if columns is None:
        second = out[:, lo:T, None]
    else:
        second = out[:, lo:T, jnp.asarray(columns)]
    return out, second


if __name__ == "__main__":
    alpha = 0.3
    key0, key1, key2 = jax.random.split(jax.random.PRNGKey(0), 3)

    # Case 1: canonical small shape, single time chunk.
    B, T, C = 2, 8, 16
    columns = [0, 5]
    pre_step = 2
    x = jax.random.normal(key0, (B, T, C), dtype=jnp.float32)

    out, sel = es_normalize(x, alpha, columns=columns, pre_step=pre_step)
    out = jax.block_until_ready(out)
    sel = jax.block_until_ready(sel)
    ref_out, ref_sel = _reference(x, alpha, columns=columns, pre_step=pre_step)

    assert out.shape == (B, T, C)
    assert sel.shape == (B, pre_step + 1, len(columns))
    assert jnp.allclose(out, ref_out, atol=1e-5, rtol=1e-5)
    assert jnp.allclose(sel, ref_sel, atol=1e-5, rtol=1e-5)

    # Case 2: multiple time chunks + a partial last chunk (exercises the
    # cross-chunk fp32 carry, the pl.when seed, and the OOB-tail masking).
    B2, T2, C2 = 2, 20, 16
    x2 = jax.random.normal(key1, (B2, T2, C2), dtype=jnp.float32)
    out2, sel2 = es_normalize(x2, alpha, columns=None, pre_step=1, block_t=8)
    out2 = jax.block_until_ready(out2)
    sel2 = jax.block_until_ready(sel2)
    ref_out2, ref_sel2 = _reference(x2, alpha, columns=None, pre_step=1)

    assert out2.shape == (B2, T2, C2)
    assert sel2.shape == (B2, 2, 1, C2)
    assert jnp.allclose(out2, ref_out2, atol=1e-5, rtol=1e-5)
    assert jnp.allclose(sel2, ref_sel2, atol=1e-5, rtol=1e-5)

    # Case 3: B == 1 with C % 256 == 0 -> channel-split parallel axis (nc=2),
    # plus a partial last chunk.
    B3, T3, C3 = 1, 40, 256
    x3 = jax.random.normal(key2, (B3, T3, C3), dtype=jnp.float32)
    out3, sel3 = es_normalize(x3, alpha, columns=[3, 7, 100], pre_step=0,
                              block_t=16)
    out3 = jax.block_until_ready(out3)
    sel3 = jax.block_until_ready(sel3)
    ref_out3, ref_sel3 = _reference(x3, alpha, columns=[3, 7, 100], pre_step=0)

    assert out3.shape == (B3, T3, C3)
    assert sel3.shape == (B3, 1, 3)
    assert jnp.allclose(out3, ref_out3, atol=1e-5, rtol=1e-5)
    assert jnp.allclose(sel3, ref_sel3, atol=1e-5, rtol=1e-5)

    print("KERNEL_OK")
</pallas_src>

<mosaic_0001>
module attributes {stable_mosaic.version = 11 : i64} {
  func.func @_es_kernel(%arg0: i32, %arg1: i32, %arg2: i32, %arg3: memref<8x8xf32, #tpu.memory_space<vmem>>, %arg4: memref<8x1xf32, #tpu.memory_space<vmem>>, %arg5: memref<1x8x16xf32, #tpu.memory_space<vmem>>, %arg6: memref<1x8x16xf32, #tpu.memory_space<vmem>>, %arg7: memref<1x16xf32, #tpu.memory_space<vmem>>) attributes {dimension_semantics = [#tpu.dimension_semantics<parallel>, #tpu.dimension_semantics<parallel>, #tpu.dimension_semantics<arbitrary>], iteration_bounds = array<i64: 2, 1, 1>, scalar_prefetch = 0 : i64, scratch_operands = 1 : i64, tpu.core_type = #tpu.core_type<tc>, window_params = [{pipeline_mode = #tpu.pipeline_mode<synchronous>, transform_indices = @transform_0, window_bounds = array<i64: 8, 8>}, {pipeline_mode = #tpu.pipeline_mode<synchronous>, transform_indices = @transform_1, window_bounds = array<i64: 8, 1>}, {transform_indices = @transform_2, window_bounds = array<i64: 1, 8, 16>}, {transform_indices = @transform_3, window_bounds = array<i64: 1, 8, 16>}]} {
    %c0_i32 = arith.constant 0 : i32
    %0 = arith.cmpi eq, %arg2, %c0_i32 : i32
    %1 = arith.extui %0 : i1 to i32
    %c0_i32_0 = arith.constant 0 : i32
    %2 = arith.cmpi ne, %1, %c0_i32_0 : i32
    scf.if %2 {
      %c0_14 = arith.constant 0 : index
      %c0_15 = arith.constant 0 : index
      %c0_16 = arith.constant 0 : index
      %18 = vector.load %arg5[%c0_14, %c0_15, %c0_16] : memref<1x8x16xf32, #tpu.memory_space<vmem>>, vector<1x1x16xf32>
      %19 = vector.shape_cast %18 : vector<1x1x16xf32> to vector<1x16xf32>
      %c0_17 = arith.constant 0 : index
      %c0_18 = arith.constant 0 : index
      %20 = vector.load %arg7[%c0_17, %c0_18] : memref<1x16xf32, #tpu.memory_space<vmem>>, vector<1x16xf32>
      tpu.vector_store %arg7[%c0_17, %c0_18], %19 {strides = array<i32>} : memref<1x16xf32, #tpu.memory_space<vmem>>, vector<1x16xf32>,
    } else {
    }
    %c0 = arith.constant 0 : index
    %c0_1 = arith.constant 0 : index
    %c0_2 = arith.constant 0 : index
    %3 = vector.load %arg5[%c0, %c0_1, %c0_2] : memref<1x8x16xf32, #tpu.memory_space<vmem>>, vector<1x8x16xf32>
    %4 = vector.shape_cast %3 : vector<1x8x16xf32> to vector<8x16xf32>
    %c0_3 = arith.constant 0 : index
    %c0_4 = arith.constant 0 : index
    %5 = vector.load %arg3[%c0_3, %c0_4] : memref<8x8xf32, #tpu.memory_space<vmem>>, vector<8x8xf32>
    %cst = arith.constant dense<0.000000e+00> : vector<8x16xf32>
    %6 = tpu.matmul %5, %4, %cst {dimension_numbers = #tpu.dot_dimension_numbers<[1], [0], [0], [1], [0, 0, 1, 1], [], []>} : vector<8x8xf32>, vector<8x16xf32>, vector<8x16xf32> -> vector<8x16xf32>
    %c0_5 = arith.constant 0 : index
    %c0_6 = arith.constant 0 : index
    %7 = vector.load %arg4[%c0_5, %c0_6] : memref<8x1xf32, #tpu.memory_space<vmem>>, vector<8x1xf32>
    %c0_7 = arith.constant 0 : index
    %c0_8 = arith.constant 0 : index
    %8 = vector.load %arg7[%c0_7, %c0_8] : memref<1x16xf32, #tpu.memory_space<vmem>>, vector<1x16xf32>
    %9 = vector.broadcast %7 : vector<8x1xf32> to vector<8x16xf32>
    %10 = vector.broadcast %8 : vector<1x16xf32> to vector<8x16xf32>
    %11 = arith.mulf %9, %10 : vector<8x16xf32>
    %12 = arith.addf %6, %11 : vector<8x16xf32>
    %c0_9 = arith.constant 0 : index
    %c0_10 = arith.constant 0 : index
    %c0_11 = arith.constant 0 : index
    %13 = vector.load %arg6[%c0_9, %c0_10, %c0_11] : memref<1x8x16xf32, #tpu.memory_space<vmem>>, vector<1x8x16xf32>
    %14 = vector.shape_cast %13 : vector<1x8x16xf32> to vector<8x16xf32>
    %15 = vector.shape_cast %12 : vector<8x16xf32> to vector<1x8x16xf32>
    tpu.vector_store %arg6[%c0_9, %c0_10, %c0_11], %15 {strides = array<i32>} : memref<1x8x16xf32, #tpu.memory_space<vmem>>, vector<1x8x16xf32>,
    %16 = vector.extract_strided_slice %12 {offsets = [7, 0], sizes = [1, 16], strides = [1, 1]} : vector<8x16xf32> to vector<1x16xf32>
    %c0_12 = arith.constant 0 : index
    %c0_13 = arith.constant 0 : index
    %17 = vector.load %arg7[%c0_12, %c0_13] : memref<1x16xf32, #tpu.memory_space<vmem>>, vector<1x16xf32>
    tpu.vector_store %arg7[%c0_12, %c0_13], %16 {strides = array<i32>} : memref<1x16xf32, #tpu.memory_space<vmem>>, vector<1x16xf32>,
    return
  }
  func.func @transform_0(%arg0: i32, %arg1: i32, %arg2: i32) -> (i32, i32) {
    %c0_i32 = arith.constant 0 : i32
    %c0_i32_0 = arith.constant 0 : i32
    %c0_i32_1 = arith.constant 0 : i32
    return %c0_i32, %c0_i32_0 : i32, i32
  }
  func.func @transform_1(%arg0: i32, %arg1: i32, %arg2: i32) -> (i32, i32) {
    %c0_i32 = arith.constant 0 : i32
    %c0_i32_0 = arith.constant 0 : i32
    %c0_i32_1 = arith.constant 0 : i32
    return %c0_i32, %c0_i32_0 : i32, i32
  }
  func.func @transform_2(%arg0: i32, %arg1: i32, %arg2: i32) -> (i32, i32, i32) {
    %c0_i32 = arith.constant 0 : i32
    return %arg0, %arg2, %arg1 : i32, i32, i32
  }
  func.func @transform_3(%arg0: i32, %arg1: i32, %arg2: i32) -> (i32, i32, i32) {
    %c0_i32 = arith.constant 0 : i32
    return %arg0, %arg2, %arg1 : i32, i32, i32
  }
}

</mosaic_0001>

<llo_original>
// kernel: tpu_custom_call.1
$region0: #{tpu_custom_call.1}
  #allocation0 [shape = 'u32[]', space=smem, size = 0x4, offset = 0x4, fixed_abs, tag = 'smem constant byte address 0x4 - core index']
  #allocation1 [shape = 'u32[144,128]{1,0:T(1,128)}', space=vmem, size = 0x12000, scoped, tag = 'internal scratch']
  #allocation2 [shape = 'f32[1,16]{1,0:T(1,128)}', space=vmem, size = 0x200, scoped, tag = 'scratch operand']
  %s0 = inlined_call_operand.vmem [shape: f32[8,8], index: 0, kind: input, shape index: {}]
  %s1 = inlined_call_operand.vmem [shape: f32[8,1], index: 1, kind: input, shape index: {}]
  %s2 = inlined_call_operand.hbm [shape: f32[2,8,16], index: 2, kind: input, shape index: {}]
  %s3 = inlined_call_operand.hbm [shape: f32[2,8,16], index: 3, kind: output, shape index: {}]
  %s4 = sld [smem:[#allocation0]]
  $region53: #{tpu_custom_call.1} parent=0
    _
  %s6 = ssub.s32 1, %s4
  %s7 = scalar_select 0, %s6, %s4
  $region1: #{tpu_custom_call.1} parent=0
    #allocation3 [shape = 'u8[8192]{0}', space=vmem, size = 0x2000, scoped, tag = 'input window, operand 2']
    #allocation4 [shape = 's32[2]{0}', space=sflag, size = 0x8, scoped, tag = 'scoped memory for tpu_custom_call.1']
    #allocation5 [shape = 's32[2]{0}', space=sflag, size = 0x8, scoped, tag = 'scoped memory for tpu_custom_call.1']
    #allocation6 [shape = 'u8[8192]{0}', space=vmem, size = 0x2000, scoped, tag = 'output window, operand 0']
    %8 = vsyncpa [#allocation4], 0
    %s9 = scalar_lea.sflag [#allocation4], 1
    %10 = vsyncpa %s9, 0
    %11 = vsyncpa [#allocation5], 0
    %s12 = scalar_lea.sflag [#allocation5], 1
    %13 = vsyncpa %s12, 0
    loop: start=0, step=1, limit=4
    $region2: #{tpu_custom_call.1} parent=1 // loop_pre_header
      _
    $region3: #{tpu_custom_call.1} parent=1 // loop_header
      %s15 = sphi 0, %s19
      %p16 = scmp.ge.s32.totalorder %s15, 4
      %s22 = sphi 0, %s41
      %s23 = sphi 0, %s37
      %s24 = sphi 0, %s33
      %s25 = sphi 0, %s22
      %s26 = sphi 0, %s23
      %s27 = sphi 0, %s24
      %s28 = sphi 0, %s25
      %s29 = sphi 0, %s26
      %s30 = sphi 0, %s27
      %s42 = sphi 0, %s42
      %s44 = sphi 0, %s42
      %s45 = sphi 0, %s44
      %s59 = sphi 0, %s45
      %s63 = sphi 0, %s63
      %s65 = sphi 0, %s63
      %s66 = sphi 0, %s65
      %s80 = sphi 0, %s66
      %s90 = sphi 0, %s92
      %s93 = sphi 0, %s90
      %s94 = sphi 0, %s93
      %s110 = sphi 0, %s94
      %s120 = sphi 0, %s122
      %s123 = sphi 0, %s120
      %s124 = sphi 0, %s123
      %s140 = sphi 0, %s124
    $region4: #{tpu_custom_call.1} parent=1 // loop_header_branch
      %18 = sbr.rel (%p16) target = $region8
    $region5: #{tpu_custom_call.1} parent=1 // loop_body
      %s20 = ssub.s32 %s15, 1
      %s21 = ssub.s32 %s15, 2
      %s31 = sadd.s32 1, %s24
      %p32 = scmp.ge.s32.totalorder %s31, 1
      %s33 = scalar_select %p32, 0, %s31
      %s34 = sadd.s32 1, %s23
      %s35 = scalar_select %p32, %s34, %s23
      %p36 = scmp.ge.s32.totalorder %s35, 1
      %s37 = scalar_select %p36, 0, %s35
      %s38 = sadd.s32 1, %s22
      %s39 = scalar_select %p36, %s38, %s22
      %p40 = scmp.ge.s32.totalorder %s39, 2
      %s41 = scalar_select %p40, 0, %s39
      %s43 = sadd.s32 %s42, 1
      %p46 = scmp.eq.s32.totalorder %s15, 1
      %p47 = scmp.ne.s32.totalorder %s42, %s44
      %p48 = scmp.eq.s32.totalorder %s15, 0
      %p49 = por %p47, %p48
      %p50 = scmp.ne.s32.totalorder %s42, %s44
      %p51 = scmp.eq.s32.totalorder %s20, 1
      %p52 = por %p50, %p51
      %p53 = scmp.ne.s32.totalorder %s44, %s45
      %p54 = scmp.eq.s32.totalorder %s20, 0
      %p55 = por %p53, %p54
      %p56 = scmp.ne.s32.totalorder %s44, %s45
      %p57 = scmp.eq.s32.totalorder %s21, 1
      %p58 = por %p56, %p57
      %p60 = scmp.ne.s32.totalorder %s45, %s59
      %p61 = scmp.eq.s32.totalorder %s21, 0
      %p62 = por %p60, %p61
      %s64 = sadd.s32 %s63, 1
      %p67 = scmp.eq.s32.totalorder %s15, 1
      %p68 = scmp.ne.s32.totalorder %s63, %s65
      %p69 = scmp.eq.s32.totalorder %s15, 0
      %p70 = por %p68, %p69
      %p71 = scmp.ne.s32.totalorder %s63, %s65
      %p72 = scmp.eq.s32.totalorder %s20, 1
      %p73 = por %p71, %p72
      %p74 = scmp.ne.s32.totalorder %s65, %s66
      %p75 = scmp.eq.s32.totalorder %s20, 0
      %p76 = por %p74, %p75
      %p77 = scmp.ne.s32.totalorder %s65, %s66
      %p78 = scmp.eq.s32.totalorder %s21, 1
      %p79 = por %p77, %p78
      %p81 = scmp.ne.s32.totalorder %s66, %s80
      %p82 = scmp.eq.s32.totalorder %s21, 0
      %p83 = por %p81, %p82
      %s84 = ssub.s32 %s22, %s41
      %s85 = ssub.s32 %s24, %s33
      %s86 = sor.u32 %s84, %s85
      %s87 = ssub.s32 %s23, %s37
      %s88 = sor.u32 %s86, %s87
      %p89 = scmp.eq.s32.totalorder %s88, 0
      %s91 = sadd.s32 %s90, 1
      %s92 = scalar_select %p89, %s90, %s91
      %p95 = pneg %p89
      %p96 = scmp.eq.s32.totalorder %s15, 1
      %p97 = por %p95, %p96
      %p98 = scmp.ne.s32.totalorder %s90, %s93
      %p99 = scmp.eq.s32.totalorder %s15, 0
      %p100 = por %p98, %p99
      %p101 = scmp.ne.s32.totalorder %s90, %s93
      %p102 = scmp.eq.s32.totalorder %s20, 1
      %p103 = por %p101, %p102
      %p104 = scmp.ne.s32.totalorder %s93, %s94
      %p105 = scmp.eq.s32.totalorder %s20, 0
      %p106 = por %p104, %p105
      %p107 = scmp.ne.s32.totalorder %s93, %s94
      %p108 = scmp.eq.s32.totalorder %s21, 1
      %p109 = por %p107, %p108
      %p111 = scmp.ne.s32.totalorder %s94, %s110
      %p112 = scmp.eq.s32.totalorder %s21, 0
      %p113 = por %p111, %p112
      %s114 = ssub.s32 %s22, %s41
      %s115 = ssub.s32 %s24, %s33
      %s116 = sor.u32 %s114, %s115
      %s117 = ssub.s32 %s23, %s37
      %s118 = sor.u32 %s116, %s117
      %p119 = scmp.eq.s32.totalorder %s118, 0
      %s121 = sadd.s32 %s120, 1
      %s122 = scalar_select %p119, %s120, %s121
      %p125 = pneg %p119
      %p126 = scmp.eq.s32.totalorder %s15, 1
      %p127 = por %p125, %p126
      %p128 = scmp.ne.s32.totalorder %s120, %s123
      %p129 = scmp.eq.s32.totalorder %s15, 0
      %p130 = por %p128, %p129
      %p131 = scmp.ne.s32.totalorder %s120, %s123
      %p132 = scmp.eq.s32.totalorder %s20, 1
      %p133 = por %p131, %p132
      %p134 = scmp.ne.s32.totalorder %s123, %s124
      %p135 = scmp.eq.s32.totalorder %s20, 0
      %p136 = por %p134, %p135
      %p137 = scmp.ne.s32.totalorder %s123, %s124
      %p138 = scmp.eq.s32.totalorder %s21, 1
      %p139 = por %p137, %p138
      %p141 = scmp.ne.s32.totalorder %s124, %s140
      %p142 = scmp.eq.s32.totalorder %s21, 0
      %p143 = por %p141, %p142
      %p144 = scmp.le.s32.totalorder 1, %s15
      %p145 = scmp.lt.s32.totalorder %s15, 3
      %p146 = pnand %p144, %p145
      %p147 = pneg %p146
      // Predicated region
      $region9: #{tpu_custom_call.1} parent=5 // pred_check
        _
      $region10: #{tpu_custom_call.1} parent=5 // pred_check_branch
        %149 = sbr.rel (%p146) target = $region12
      $region11: #{tpu_custom_call.1} parent=5 // pred_region
        %s150 = ssub.s32 %s15, 1
        // Predicated region
        $region13: #{tpu_custom_call.1} parent=11 // pred_check
          %p151 = pneg %p55
        $region14: #{tpu_custom_call.1} parent=11 // pred_check_branch
          %153 = sbr.rel (%p151) target = $region16
        $region15: #{tpu_custom_call.1} parent=11 // pred_region
          _
        $region16: #{tpu_custom_call.1} parent=11 // pred_fallthru
          _
        // Predicated region
        $region17: #{tpu_custom_call.1} parent=11 // pred_check
          %p154 = pneg %p76
        $region18: #{tpu_custom_call.1} parent=11 // pred_check_branch
          %156 = sbr.rel (%p154) target = $region20
        $region19: #{tpu_custom_call.1} parent=11 // pred_region
          _
        $region20: #{tpu_custom_call.1} parent=11 // pred_fallthru
          _
      $region12: #{tpu_custom_call.1} parent=5 // pred_fallthru
        _
      %p157 = scmp.lt.s32.totalorder %s15, 2
      // Predicated region
      $region21: #{tpu_custom_call.1} parent=5 // pred_check
        %p158 = pneg %p157
      $region22: #{tpu_custom_call.1} parent=5 // pred_check_branch
        %160 = sbr.rel (%p158) target = $region24
      $region23: #{tpu_custom_call.1} parent=5 // pred_region
        // Predicated region
        $region25: #{tpu_custom_call.1} parent=23 // pred_check
          %p161 = pneg %p100
        $region26: #{tpu_custom_call.1} parent=23 // pred_check_branch
          %163 = sbr.rel (%p161) target = $region28
        $region27: #{tpu_custom_call.1} parent=23 // pred_region
          %s164 = sand.u32 %s90, 1
          %s165 = scalar_lea.sflag [#allocation4], %s164
          %s166 = sand.u32 %s90, 1
          %s167 = smul.addr %s166, 8
          %s168 = scalar_lea.vmem [#allocation3], %s167
          %s170 = ssub.s32 128, 128
          %171 = vsyncadd %s165, %s170
          %s172 = sadd.s32 %s23, %s24
          %s173 = sadd.s32 %s172, %s22
          %s174 = smul.addr %s173, 128
          %s175 = scalar_lea.hbm %s2, %s174
          %s177 = sshll.u32 %s168, 4
          %s178 = int_to_ptr.vmem [resolvable:$true] %s177
          %180 = dma.hbm_to_vmem [thread:$0]  %s175, 128, %s178, %s165
        $region28: #{tpu_custom_call.1} parent=23 // pred_fallthru
          _
      $region24: #{tpu_custom_call.1} parent=5 // pred_fallthru
        _
      %p181 = scmp.le.s32.totalorder 1, %s15
      %p182 = scmp.lt.s32.totalorder %s15, 3
      %p183 = pnand %p181, %p182
      %p184 = pneg %p183
      // Predicated region
      $region29: #{tpu_custom_call.1} parent=5 // pred_check
        _
      $region30: #{tpu_custom_call.1} parent=5 // pred_check_branch
        %186 = sbr.rel (%p183) target = $region32
      $region31: #{tpu_custom_call.1} parent=5 // pred_region
        %s187 = ssub.s32 %s15, 1
        %s188 = sand.u32 %s93, 1
        %s189 = scalar_lea.sflag [#allocation4], %s188
        %s190 = sand.u32 %s93, 1
        %s191 = smul.addr %s190, 8
        %s192 = scalar_lea.vmem [#allocation3], %s191
        // Predicated region
        $region33: #{tpu_custom_call.1} parent=31 // pred_check
          %p193 = pneg %p106
        $region34: #{tpu_custom_call.1} parent=31 // pred_check_branch
          %195 = sbr.rel (%p193) target = $region36
        $region35: #{tpu_custom_call.1} parent=31 // pred_region
          %196 = dma.done %s189, 128
        $region36: #{tpu_custom_call.1} parent=31 // pred_fallthru
          _
        %p197 = pneg %p55
        %p198 = pneg %p52
        %p199 = pneg %p76
        %p200 = pneg %p73
        %s201 = sand.u32 %s93, 1
        %s202 = scalar_lea.sflag [#allocation4], %s201
        %s203 = sand.u32 %s93, 1
        %s204 = smul.addr %s203, 8
        %s205 = scalar_lea.vmem [#allocation3], %s204
        %p206 = pneg %p106
        %p207 = pneg %p103
        %p208 = pneg %p136
        %p209 = pneg %p133
        %s210 = sand.u32 %s123, 1
        %s211 = scalar_lea.sflag [#allocation5], %s210
        %s212 = sand.u32 %s123, 1
        %s213 = smul.addr %s212, 8
        %s214 = scalar_lea.vmem [#allocation6], %s213
        %p215 = scmp.eq.s32.totalorder %s27, 0
        // Predicated region
        $region37: #{tpu_custom_call.1} parent=31 // pred_check
          %p216 = pneg %p215
        $region38: #{tpu_custom_call.1} parent=31 // pred_check_branch
          %218 = sbr.rel (%p216) target = $region40
        $region39: #{tpu_custom_call.1} parent=31 // pred_region
          %v219 = vld [vmem:[%s192] sm:$0x1]
          %vm220 = vcmask 122880
          %221 = vst.msk [vmem:[#allocation2] sm:$0x1] %vm220, %v219
        $region40: #{tpu_custom_call.1} parent=31 // pred_fallthru
          _
        %v222 = vld [vmem:[%s192] sm:$0xff]
        %v223 = vld [vmem:[%s0] sm:$0xff]
        %v224 = vld [vmem:[%s1] sm:$0xff]
        %v225 = vld [vmem:[#allocation2] sm:$0x1]
        %227 = vset.pattern.permute.xlu0 0
        %228 = vperm.xlu0 %227, %v224
        %v229 = vpop.permute.xlu0 %228
        %v232 = vlaneseq
        %v233 = vshrl.u32 %v232, 7
        %v234 = vsub.s32 0, %v233
        %v235 = vrot.slane %v225, %v234
        %v237 = vmul.f32 %v229, %v235
        %vm238 = vcmask 64512
        %v240 = vsel %vm238, %v223, 0
        %242 = vmatprep.subr.mxu0 0.0
        %243 = vmatpush1.msra.mxu0 0.0
        %244 = vmatprep.subr.mxu0 0.0
        %245 = vmatpush1.msra.mxu0 0.0
        %246 = vmatprep.subr.mxu0 0.0
        %247 = vmatpush1.msra.mxu0 0.0
        %248 = vmatprep.subr.mxu0 0.0
        %249 = vmatpush1.msra.mxu0 0.0
        %250 = vmatprep.subr.mxu0 0.0
        %251 = vmatpush1.msra.mxu0 0.0
        %252 = vmatprep.subr.mxu0 0.0
        %253 = vmatpush1.msra.mxu0 0.0
        %254 = vmatprep.subr.mxu0 0.0
        %255 = vmatpush1.msra.mxu0 0.0
        %256 = vmatprep.subr.mxu0 0.0
        %257 = vmatpush1.msra.mxu0 0.0
        %258 = vmatprep.subr.mxu0 0.0
        %259 = vmatpush1.msra.mxu0 0.0
        %260 = vmatprep.subr.mxu0 0.0
        %261 = vmatpush1.msra.mxu0 0.0
        %262 = vmatprep.subr.mxu0 0.0
        %263 = vmatpush1.msra.mxu0 0.0
        %264 = vmatprep.subr.mxu0 0.0
        %265 = vmatpush1.msra.mxu0 0.0
        %266 = vmatprep.subr.mxu0 0.0
        %267 = vmatpush1.msra.mxu0 0.0
        %268 = vmatprep.subr.mxu0 0.0
        %269 = vmatpush1.msra.mxu0 0.0
        %270 = vmatprep.subr.mxu0 0.0
        %271 = vmatpush1.msra.mxu0 0.0
        %272 = vmatprep.subr.mxu0 0.0
        %273 = vmatpush1.msra.mxu0 %v222
        %274 = vmatprep.subr.mxu0 0.0
        %275 = vmatpush2.msra.mxu0 0.0
        %276 = vmatprep.subr.mxu0 0.0
        %277 = vmatpush2.msra.mxu0 0.0
        %278 = vmatprep.subr.mxu0 0.0
        %279 = vmatpush2.msra.mxu0 0.0
        %280 = vmatprep.subr.mxu0 0.0
        %281 = vmatpush2.msra.mxu0 0.0
        %282 = vmatprep.subr.mxu0 0.0
        %283 = vmatpush2.msra.mxu0 0.0
        %284 = vmatprep.subr.mxu0 0.0
        %285 = vmatpush2.msra.mxu0 0.0
        %286 = vmatprep.subr.mxu0 0.0
        %287 = vmatpush2.msra.mxu0 0.0
        %288 = vmatprep.subr.mxu0 0.0
        %289 = vmatpush2.msra.mxu0 0.0
        %290 = vmatprep.subr.mxu0 0.0
        %291 = vmatpush2.msra.mxu0 0.0
        %292 = vmatprep.subr.mxu0 0.0
        %293 = vmatpush2.msra.mxu0 0.0
        %294 = vmatprep.subr.mxu0 0.0
        %295 = vmatpush2.msra.mxu0 0.0
        %296 = vmatprep.subr.mxu0 0.0
        %297 = vmatpush2.msra.mxu0 0.0
        %298 = vmatprep.subr.mxu0 0.0
        %299 = vmatpush2.msra.mxu0 0.0
        %300 = vmatprep.subr.mxu0 0.0
        %301 = vmatpush2.msra.mxu0 0.0
        %302 = vmatprep.subr.mxu0 0.0
        %303 = vmatpush2.msra.mxu0 0.0
        %304 = vmatprep.subr.mxu0 0.0
        %305 = vmatpush2.msra.mxu0 0.0
        %306 = vmatprep.mubr.f32.mxu0 0.0
        %307 = vmatmul.mubr.f32.gmra.mxu0 %v240
        %v308 = vpop.f32.mrf.mxu0
        %v309 = vadd.f32 %v237, %v308
        %v310 = vpop.f32.mrf.mxu0
        %311 = vdwg.mxu0
        %vm312 = vcmask 130048
        %313 = vst.msk [vmem:[%s214] sm:$0xff] %vm312, %v309
        %vm314 = vcmask 130055
        %315 = vst.msk [vmem:[#allocation2 - $0x7] sm:$0x80] %vm314, %v309
        %s316 = sand.u32 %s123, 1
        %s317 = scalar_lea.sflag [#allocation5], %s316
        %s318 = sand.u32 %s123, 1
        %s319 = smul.addr %s318, 8
        %s320 = scalar_lea.vmem [#allocation6], %s319
        // Predicated region
        $region41: #{tpu_custom_call.1} parent=31 // pred_check
          %p321 = pneg %p133
        $region42: #{tpu_custom_call.1} parent=31 // pred_check_branch
          %323 = sbr.rel (%p321) target = $region44
        $region43: #{tpu_custom_call.1} parent=31 // pred_region
          %s325 = ssub.s32 128, 128
          %326 = vsyncadd %s317, %s325
          %s327 = sadd.s32 %s26, %s27
          %s328 = sadd.s32 %s327, %s25
          %s329 = smul.addr %s328, 128
          %s330 = scalar_lea.hbm %s3, %s329
          %s332 = sshll.u32 %s320, 4
          %s333 = int_to_ptr.vmem [resolvable:$true] %s332
          %335 = dma.vmem_to_hbm [thread:$0]  %s333, 128, %s330, %s317
        $region44: #{tpu_custom_call.1} parent=31 // pred_fallthru
          _
      $region32: #{tpu_custom_call.1} parent=5 // pred_fallthru
        _
      %p336 = scmp.le.s32.totalorder 2, %s15
      // Predicated region
      $region45: #{tpu_custom_call.1} parent=5 // pred_check
        %p337 = pneg %p336
      $region46: #{tpu_custom_call.1} parent=5 // pred_check_branch
        %339 = sbr.rel (%p337) target = $region48
      $region47: #{tpu_custom_call.1} parent=5 // pred_region
        %s340 = ssub.s32 %s15, 2
        // Predicated region
        $region49: #{tpu_custom_call.1} parent=47 // pred_check
          %p341 = pneg %p139
        $region50: #{tpu_custom_call.1} parent=47 // pred_check_branch
          %343 = sbr.rel (%p341) target = $region52
        $region51: #{tpu_custom_call.1} parent=47 // pred_region
          %s344 = sand.u32 %s124, 1
          %s345 = scalar_lea.sflag [#allocation5], %s344
          %s346 = sand.u32 %s124, 1
          %s347 = smul.addr %s346, 8
          %s348 = scalar_lea.vmem [#allocation6], %s347
          %349 = dma.done %s345, 128
        $region52: #{tpu_custom_call.1} parent=47 // pred_fallthru
          _
      $region48: #{tpu_custom_call.1} parent=5 // pred_fallthru
        _
    $region6: #{tpu_custom_call.1} parent=1 // loop_footer
      %s19 = sadd.s32 1, %s15
    $region7: #{tpu_custom_call.1} parent=1 // loop_footer_branch
      %14 = sbr.rel target = $region3
    $region8: #{tpu_custom_call.1} parent=1 // loop_exit
      _
    %350 = vsyncpa [#allocation4], 1
    %s351 = scalar_lea.sflag [#allocation4], 1
    %352 = vsyncpa %s351, 1
    %353 = vsyncpa [#allocation5], 1
    %s354 = scalar_lea.sflag [#allocation5], 1
    %355 = vsyncpa %s354, 1

</llo_original>
